<compile_context>
chip_gen: v5e
topology: v5e:2x2
jax: 0.10.0
libtpu: 0.0.40
codegen_flags: <defaults>
</compile_context>

<pallas_src>
import jax
import jax.numpy as jnp
from jax.experimental import pallas as pl
from jax.experimental.pallas import tpu as pltpu


def dueling_c51_kernel(x_ref,
                       w1_ref, b1_ref,      # obs -> 512   (bf16 weight)
                       w2_ref, b2_ref,      # 512 -> 256   (bf16 weight)
                       wh_ref, bh_ref,      # fused 256 -> 256 (value|advantage first layers)
                       wv2_ref, bv2_ref,    # 128 -> atoms
                       wa2_ref, ba2_ref,    # 128 -> action_dim*atoms
                       out_ref):            # (TB, action_dim*atoms)
    x = x_ref[...]                                                    # (TB, obs)

    # Shared trunk (weights streamed as bf16, math in f32).
    w1 = w1_ref[...].astype(jnp.float32)
    w2 = w2_ref[...].astype(jnp.float32)
    h1 = jnp.maximum(
        jnp.dot(x, w1, preferred_element_type=jnp.float32) + b1_ref[...], 0.0)
    h2 = jnp.maximum(
        jnp.dot(h1, w2, preferred_element_type=jnp.float32) + b2_ref[...], 0.0)  # (TB, 256)

    # Fused value/advantage first projections: one 256-wide matmul, then free
    # lane slices at the 128 boundary.
    heads = jnp.maximum(
        jnp.dot(h2, wh_ref[...], preferred_element_type=jnp.float32) + bh_ref[...], 0.0)
    vh = heads[:, :128]                                               # value stream hidden
    ah = heads[:, 128:]                                               # advantage stream hidden

    # Final projections: value (TB, atoms); advantage flat (TB, A*atoms).
    value = jnp.dot(vh, wv2_ref[...], preferred_element_type=jnp.float32) + bv2_ref[...]
    adv_flat = jnp.dot(ah, wa2_ref[...], preferred_element_type=jnp.float32) + ba2_ref[...]

    tb = adv_flat.shape[0]
    atoms = value.shape[-1]
    a_dim = adv_flat.shape[-1] // atoms

    # Dueling combination + C51 softmax (atoms on the lane/last axis).
    adv = adv_flat.reshape(tb, a_dim, atoms)                          # same order as torch .view
    adv_mean = jnp.mean(adv, axis=1, keepdims=True)                   # (TB, 1, atoms)
    q_atoms = value[:, None, :] + (adv - adv_mean)                    # (TB, A, atoms)

    q_max = jnp.max(q_atoms, axis=2, keepdims=True)
    e = jnp.exp(q_atoms - q_max)
    denom = jnp.sum(e, axis=2, keepdims=True)
    probs = e * pl.reciprocal(denom, approx=False)   # exact: must match softmax at 1e-5
    probs = jnp.maximum(probs, 1e-5)

    # Lane-dense store: write the flat (TB, A*atoms) slab.
    out_ref[...] = probs.reshape(tb, a_dim * atoms)


def dueling_c51_forward(x, params, action_dim, atoms, block_b=1024):
    """Runs the Pallas kernel; returns (B, action_dim, atoms) probabilities."""
    B, obs_dim = x.shape
    flat_out = action_dim * atoms
    TB = min(B, block_b)           # batch tile; keep modest for v7x/v5e VMEM budgets
    grid = (pl.cdiv(B, TB),)

    args = (x,
            params['w1'], params['b1'],
            params['w2'], params['b2'],
            params['wh'], params['bh'],
            params['wv2'], params['bv2'],
            params['wa2'], params['ba2'])

    def resident(arr):
        # Full-array block, constant index_map -> loaded once, stays in VMEM.
        return pl.BlockSpec(arr.shape, lambda i: (0,) * arr.ndim)

    in_specs = [pl.BlockSpec((TB, obs_dim), lambda i: (i, 0))]
    in_specs += [resident(a) for a in args[1:]]

    out_flat = pl.pallas_call(
        dueling_c51_kernel,
        out_shape=jax.ShapeDtypeStruct((B, flat_out), jnp.float32),
        grid=grid,
        in_specs=in_specs,
        out_specs=pl.BlockSpec((TB, flat_out), lambda i: (i, 0)),
        compiler_params=pltpu.CompilerParams(
            dimension_semantics=("parallel",)),
    )(*args)

    return out_flat.reshape(B, action_dim, atoms)


def init_params(key, obs_dim, action_dim, atoms, trunk_dtype=jnp.bfloat16):
    """PyTorch-Linear-style init: U(-1/sqrt(fan_in), 1/sqrt(fan_in)).

    Weight layout is (in_features, out_features) so matmuls are plain x @ W + b.
    Trunk weights are stored in bf16 (HBM bandwidth), head weights in f32.
    """
    def linear(key, fan_in, fan_out):
        kw, kb = jax.random.split(key)
        bound = 1.0 / jnp.sqrt(fan_in)
        w = jax.random.uniform(kw, (fan_in, fan_out), jnp.float32, -bound, bound)
        b = jax.random.uniform(kb, (1, fan_out), jnp.float32, -bound, bound)
        return w, b

    keys = jax.random.split(key, 6)
    w1, b1 = linear(keys[0], obs_dim, 512)
    w2, b2 = linear(keys[1], 512, 256)
    wv1, bv1 = linear(keys[2], 256, 128)
    wv2, bv2 = linear(keys[3], 128, atoms)
    wa1, ba1 = linear(keys[4], 256, 128)
    wa2, ba2 = linear(keys[5], 128, action_dim * atoms)

    # Fuse the two 256->128 stream projections into one 256->256 layer
    # (value columns first, advantage columns second).
    wh = jnp.concatenate([wv1, wa1], axis=1)       # (256, 256)
    bh = jnp.concatenate([bv1, ba1], axis=1)       # (1, 256)

    return dict(
        w1=w1.astype(trunk_dtype), b1=b1,
        w2=w2.astype(trunk_dtype), b2=b2,
        wh=wh, bh=bh,
        wv2=wv2, bv2=bv2,
        wa2=wa2, ba2=ba2,          # (128, A*atoms): same element order as torch .view
    )


def reference_forward(x, params, action_dim, atoms):
    """Pure-JAX reference mirroring the PyTorch module (same bf16-stored trunk)."""
    w1 = params['w1'].astype(jnp.float32)
    w2 = params['w2'].astype(jnp.float32)
    h = jnp.maximum(x @ w1 + params['b1'], 0.0)
    h = jnp.maximum(h @ w2 + params['b2'], 0.0)
    heads = jnp.maximum(h @ params['wh'] + params['bh'], 0.0)
    vh, ah = heads[:, :128], heads[:, 128:]
    value = (vh @ params['wv2'] + params['bv2'])[:, None, :]
    adv = (ah @ params['wa2'] + params['ba2']).reshape(-1, action_dim, atoms)
    q = value + (adv - jnp.mean(adv, axis=1, keepdims=True))
    probs = jax.nn.softmax(q, axis=2)
    return jnp.clip(probs, 1e-5, None)


if __name__ == "__main__":
    obs_dim = 16
    action_dim = 4
    atoms = 51
    # v_min/v_max/support are only used by q_values(), not by forward().
    batch = 2

    key = jax.random.PRNGKey(0)
    k_x, k_p = jax.random.split(key)
    x = jax.random.normal(k_x, (batch, obs_dim), jnp.float32)
    params = init_params(k_p, obs_dim, action_dim, atoms)

    out = dueling_c51_forward(x, params, action_dim, atoms)
    out = jax.block_until_ready(out)

    ref = reference_forward(x, params, action_dim, atoms)
    assert out.shape == (batch, action_dim, atoms)
    assert jnp.allclose(out, ref, atol=1e-5, rtol=1e-5), "mismatch vs JAX reference"

    print("KERNEL_OK")
</pallas_src>

<mosaic_0001>
module attributes {stable_mosaic.version = 11 : i64} {
  func.func @dueling_c51_kernel(%arg0: i32, %arg1: memref<2x16xf32, #tpu.memory_space<vmem>>, %arg2: memref<16x512xbf16, #tpu.memory_space<vmem>>, %arg3: memref<1x512xf32, #tpu.memory_space<vmem>>, %arg4: memref<512x256xbf16, #tpu.memory_space<vmem>>, %arg5: memref<1x256xf32, #tpu.memory_space<vmem>>, %arg6: memref<256x256xf32, #tpu.memory_space<vmem>>, %arg7: memref<1x256xf32, #tpu.memory_space<vmem>>, %arg8: memref<128x51xf32, #tpu.memory_space<vmem>>, %arg9: memref<1x51xf32, #tpu.memory_space<vmem>>, %arg10: memref<128x204xf32, #tpu.memory_space<vmem>>, %arg11: memref<1x204xf32, #tpu.memory_space<vmem>>, %arg12: memref<2x204xf32, #tpu.memory_space<vmem>>) attributes {dimension_semantics = [#tpu.dimension_semantics<parallel>], iteration_bounds = array<i64: 1>, scalar_prefetch = 0 : i64, scratch_operands = 0 : i64, tpu.core_type = #tpu.core_type<tc>, window_params = [{transform_indices = @transform_0, window_bounds = array<i64: 2, 16>}, {pipeline_mode = #tpu.pipeline_mode<synchronous>, transform_indices = @transform_1, window_bounds = array<i64: 16, 512>}, {pipeline_mode = #tpu.pipeline_mode<synchronous>, transform_indices = @transform_2, window_bounds = array<i64: 1, 512>}, {pipeline_mode = #tpu.pipeline_mode<synchronous>, transform_indices = @transform_3, window_bounds = array<i64: 512, 256>}, {pipeline_mode = #tpu.pipeline_mode<synchronous>, transform_indices = @transform_4, window_bounds = array<i64: 1, 256>}, {pipeline_mode = #tpu.pipeline_mode<synchronous>, transform_indices = @transform_5, window_bounds = array<i64: 256, 256>}, {pipeline_mode = #tpu.pipeline_mode<synchronous>, transform_indices = @transform_6, window_bounds = array<i64: 1, 256>}, {pipeline_mode = #tpu.pipeline_mode<synchronous>, transform_indices = @transform_7, window_bounds = array<i64: 128, 51>}, {pipeline_mode = #tpu.pipeline_mode<synchronous>, transform_indices = @transform_8, window_bounds = array<i64: 1, 51>}, {pipeline_mode = #tpu.pipeline_mode<synchronous>, transform_indices = @transform_9, window_bounds = array<i64: 128, 204>}, {pipeline_mode = #tpu.pipeline_mode<synchronous>, transform_indices = @transform_10, window_bounds = array<i64: 1, 204>}, {transform_indices = @transform_11, window_bounds = array<i64: 2, 204>}]} {
    %c0 = arith.constant 0 : index
    %c0_0 = arith.constant 0 : index
    %0 = vector.load %arg1[%c0, %c0_0] : memref<2x16xf32, #tpu.memory_space<vmem>>, vector<2x16xf32>
    %c0_1 = arith.constant 0 : index
    %c0_2 = arith.constant 0 : index
    %1 = vector.load %arg2[%c0_1, %c0_2] : memref<16x512xbf16, #tpu.memory_space<vmem>>, vector<16x512xbf16>
    %2 = arith.extf %1 : vector<16x512xbf16> to vector<16x512xf32>
    %c0_3 = arith.constant 0 : index
    %c0_4 = arith.constant 0 : index
    %3 = vector.load %arg4[%c0_3, %c0_4] : memref<512x256xbf16, #tpu.memory_space<vmem>>, vector<512x256xbf16>
    %4 = arith.extf %3 : vector<512x256xbf16> to vector<512x256xf32>
    %cst = arith.constant dense<0.000000e+00> : vector<2x512xf32>
    %5 = tpu.matmul %0, %2, %cst {dimension_numbers = #tpu.dot_dimension_numbers<[1], [0], [0], [1], [0, 0, 1, 1], [], []>} : vector<2x16xf32>, vector<16x512xf32>, vector<2x512xf32> -> vector<2x512xf32>
    %c0_5 = arith.constant 0 : index
    %c0_6 = arith.constant 0 : index
    %6 = vector.load %arg3[%c0_5, %c0_6] : memref<1x512xf32, #tpu.memory_space<vmem>>, vector<1x512xf32>
    %7 = vector.broadcast %6 : vector<1x512xf32> to vector<2x512xf32>
    %8 = arith.addf %5, %7 : vector<2x512xf32>
    %cst_7 = arith.constant 0.000000e+00 : f32
    %9 = vector.broadcast %cst_7 : f32 to vector<2x512xf32>
    %10 = arith.maximumf %8, %9 : vector<2x512xf32>
    %cst_8 = arith.constant dense<0.000000e+00> : vector<2x256xf32>
    %11 = tpu.matmul %10, %4, %cst_8 {dimension_numbers = #tpu.dot_dimension_numbers<[1], [0], [0], [1], [0, 0, 1, 1], [], []>} : vector<2x512xf32>, vector<512x256xf32>, vector<2x256xf32> -> vector<2x256xf32>
    %c0_9 = arith.constant 0 : index
    %c0_10 = arith.constant 0 : index
    %12 = vector.load %arg5[%c0_9, %c0_10] : memref<1x256xf32, #tpu.memory_space<vmem>>, vector<1x256xf32>
    %13 = vector.broadcast %12 : vector<1x256xf32> to vector<2x256xf32>
    %14 = arith.addf %11, %13 : vector<2x256xf32>
    %cst_11 = arith.constant 0.000000e+00 : f32
    %15 = vector.broadcast %cst_11 : f32 to vector<2x256xf32>
    %16 = arith.maximumf %14, %15 : vector<2x256xf32>
    %c0_12 = arith.constant 0 : index
    %c0_13 = arith.constant 0 : index
    %17 = vector.load %arg6[%c0_12, %c0_13] : memref<256x256xf32, #tpu.memory_space<vmem>>, vector<256x256xf32>
    %cst_14 = arith.constant dense<0.000000e+00> : vector<2x256xf32>
    %18 = tpu.matmul %16, %17, %cst_14 {dimension_numbers = #tpu.dot_dimension_numbers<[1], [0], [0], [1], [0, 0, 1, 1], [], []>} : vector<2x256xf32>, vector<256x256xf32>, vector<2x256xf32> -> vector<2x256xf32>
    %c0_15 = arith.constant 0 : index
    %c0_16 = arith.constant 0 : index
    %19 = vector.load %arg7[%c0_15, %c0_16] : memref<1x256xf32, #tpu.memory_space<vmem>>, vector<1x256xf32>
    %20 = vector.broadcast %19 : vector<1x256xf32> to vector<2x256xf32>
    %21 = arith.addf %18, %20 : vector<2x256xf32>
    %cst_17 = arith.constant 0.000000e+00 : f32
    %22 = vector.broadcast %cst_17 : f32 to vector<2x256xf32>
    %23 = arith.maximumf %21, %22 : vector<2x256xf32>
    %24 = vector.extract_strided_slice %23 {offsets = [0, 0], sizes = [2, 128], strides = [1, 1]} : vector<2x256xf32> to vector<2x128xf32>
    %25 = vector.extract_strided_slice %23 {offsets = [0, 128], sizes = [2, 128], strides = [1, 1]} : vector<2x256xf32> to vector<2x128xf32>
    %c0_18 = arith.constant 0 : index
    %c0_19 = arith.constant 0 : index
    %26 = vector.load %arg8[%c0_18, %c0_19] : memref<128x51xf32, #tpu.memory_space<vmem>>, vector<128x51xf32>
    %cst_20 = arith.constant dense<0.000000e+00> : vector<2x51xf32>
    %27 = tpu.matmul %24, %26, %cst_20 {dimension_numbers = #tpu.dot_dimension_numbers<[1], [0], [0], [1], [0, 0, 1, 1], [], []>} : vector<2x128xf32>, vector<128x51xf32>, vector<2x51xf32> -> vector<2x51xf32>
    %c0_21 = arith.constant 0 : index
    %c0_22 = arith.constant 0 : index
    %28 = vector.load %arg9[%c0_21, %c0_22] : memref<1x51xf32, #tpu.memory_space<vmem>>, vector<1x51xf32>
    %29 = vector.broadcast %28 : vector<1x51xf32> to vector<2x51xf32>
    %30 = arith.addf %27, %29 : vector<2x51xf32>
    %c0_23 = arith.constant 0 : index
    %c0_24 = arith.constant 0 : index
    %31 = vector.load %arg10[%c0_23, %c0_24] : memref<128x204xf32, #tpu.memory_space<vmem>>, vector<128x204xf32>
    %cst_25 = arith.constant dense<0.000000e+00> : vector<2x204xf32>
    %32 = tpu.matmul %25, %31, %cst_25 {dimension_numbers = #tpu.dot_dimension_numbers<[1], [0], [0], [1], [0, 0, 1, 1], [], []>} : vector<2x128xf32>, vector<128x204xf32>, vector<2x204xf32> -> vector<2x204xf32>
    %c0_26 = arith.constant 0 : index
    %c0_27 = arith.constant 0 : index
    %33 = vector.load %arg11[%c0_26, %c0_27] : memref<1x204xf32, #tpu.memory_space<vmem>>, vector<1x204xf32>
    %34 = vector.broadcast %33 : vector<1x204xf32> to vector<2x204xf32>
    %35 = arith.addf %32, %34 : vector<2x204xf32>
    %36 = vector.shape_cast %35 : vector<2x204xf32> to vector<2x4x51xf32>
    %cst_28 = arith.constant dense<0.000000e+00> : vector<2x51xf32>
    %37 = vector.multi_reduction <add>, %36, %cst_28 [1] : vector<2x4x51xf32> to vector<2x51xf32>
    %38 = vector.shape_cast %37 : vector<2x51xf32> to vector<2x1x51xf32>
    %cst_29 = arith.constant 4.000000e+00 : f32
    %39 = vector.broadcast %cst_29 : f32 to vector<2x1x51xf32>
    %40 = arith.divf %38, %39 : vector<2x1x51xf32>
    %41 = vector.shape_cast %30 : vector<2x51xf32> to vector<2x1x51xf32>
    %42 = vector.broadcast %40 : vector<2x1x51xf32> to vector<2x4x51xf32>
    %43 = arith.subf %36, %42 : vector<2x4x51xf32>
    %44 = vector.broadcast %41 : vector<2x1x51xf32> to vector<2x4x51xf32>
    %45 = arith.addf %44, %43 : vector<2x4x51xf32>
    %cst_30 = arith.constant dense<0xFF800000> : vector<2x4xf32>
    %46 = vector.multi_reduction <maximumf>, %45, %cst_30 [2] : vector<2x4x51xf32> to vector<2x4xf32>
    %47 = vector.shape_cast %46 : vector<2x4xf32> to vector<2x4x1xf32>
    %48 = vector.broadcast %47 : vector<2x4x1xf32> to vector<2x4x51xf32>
    %49 = arith.subf %45, %48 : vector<2x4x51xf32>
    %50 = math.exp %49 : vector<2x4x51xf32>
    %cst_31 = arith.constant dense<0.000000e+00> : vector<2x4xf32>
    %51 = vector.multi_reduction <add>, %50, %cst_31 [2] : vector<2x4x51xf32> to vector<2x4xf32>
    %52 = vector.shape_cast %51 : vector<2x4xf32> to vector<2x4x1xf32>
    %53 = tpu.reciprocal %52 : vector<2x4x1xf32> -> vector<2x4x1xf32>
    %54 = vector.broadcast %53 : vector<2x4x1xf32> to vector<2x4x51xf32>
    %55 = arith.mulf %50, %54 : vector<2x4x51xf32>
    %cst_32 = arith.constant 9.99999974E-6 : f32
    %56 = vector.broadcast %cst_32 : f32 to vector<2x4x51xf32>
    %57 = arith.maximumf %55, %56 : vector<2x4x51xf32>
    %58 = vector.shape_cast %57 : vector<2x4x51xf32> to vector<2x204xf32>
    %c0_33 = arith.constant 0 : index
    %c0_34 = arith.constant 0 : index
    %59 = vector.load %arg12[%c0_33, %c0_34] : memref<2x204xf32, #tpu.memory_space<vmem>>, vector<2x204xf32>
    tpu.vector_store %arg12[%c0_33, %c0_34], %58 {strides = array<i32>} : memref<2x204xf32, #tpu.memory_space<vmem>>, vector<2x204xf32>,
    return
  }
  func.func @transform_0(%arg0: i32) -> (i32, i32) {
    %c0_i32 = arith.constant 0 : i32
    %c0_i32_0 = arith.constant 0 : i32
    return %arg0, %c0_i32 : i32, i32
  }
  func.func @transform_1(%arg0: i32) -> (i32, i32) {
    %c0_i32 = arith.constant 0 : i32
    %c0_i32_0 = arith.constant 0 : i32
    %c0_i32_1 = arith.constant 0 : i32
    return %c0_i32, %c0_i32_0 : i32, i32
  }
  func.func @transform_2(%arg0: i32) -> (i32, i32) {
    %c0_i32 = arith.constant 0 : i32
    %c0_i32_0 = arith.constant 0 : i32
    %c0_i32_1 = arith.constant 0 : i32
    return %c0_i32, %c0_i32_0 : i32, i32
  }
  func.func @transform_3(%arg0: i32) -> (i32, i32) {
    %c0_i32 = arith.constant 0 : i32
    %c0_i32_0 = arith.constant 0 : i32
    %c0_i32_1 = arith.constant 0 : i32
    return %c0_i32, %c0_i32_0 : i32, i32
  }
  func.func @transform_4(%arg0: i32) -> (i32, i32) {
    %c0_i32 = arith.constant 0 : i32
    %c0_i32_0 = arith.constant 0 : i32
    %c0_i32_1 = arith.constant 0 : i32
    return %c0_i32, %c0_i32_0 : i32, i32
  }
  func.func @transform_5(%arg0: i32) -> (i32, i32) {
    %c0_i32 = arith.constant 0 : i32
    %c0_i32_0 = arith.constant 0 : i32
    %c0_i32_1 = arith.constant 0 : i32
    return %c0_i32, %c0_i32_0 : i32, i32
  }
  func.func @transform_6(%arg0: i32) -> (i32, i32) {
    %c0_i32 = arith.constant 0 : i32
    %c0_i32_0 = arith.constant 0 : i32
    %c0_i32_1 = arith.constant 0 : i32
    return %c0_i32, %c0_i32_0 : i32, i32
  }
  func.func @transform_7(%arg0: i32) -> (i32, i32) {
    %c0_i32 = arith.constant 0 : i32
    %c0_i32_0 = arith.constant 0 : i32
    %c0_i32_1 = arith.constant 0 : i32
    return %c0_i32, %c0_i32_0 : i32, i32
  }
  func.func @transform_8(%arg0: i32) -> (i32, i32) {
    %c0_i32 = arith.constant 0 : i32
    %c0_i32_0 = arith.constant 0 : i32
    %c0_i32_1 = arith.constant 0 : i32
    return %c0_i32, %c0_i32_0 : i32, i32
  }
  func.func @transform_9(%arg0: i32) -> (i32, i32) {
    %c0_i32 = arith.constant 0 : i32
    %c0_i32_0 = arith.constant 0 : i32
    %c0_i32_1 = arith.constant 0 : i32
    return %c0_i32, %c0_i32_0 : i32, i32
  }
  func.func @transform_10(%arg0: i32) -> (i32, i32) {
    %c0_i32 = arith.constant 0 : i32
    %c0_i32_0 = arith.constant 0 : i32
    %c0_i32_1 = arith.constant 0 : i32
    return %c0_i32, %c0_i32_0 : i32, i32
  }
  func.func @transform_11(%arg0: i32) -> (i32, i32) {
    %c0_i32 = arith.constant 0 : i32
    %c0_i32_0 = arith.constant 0 : i32
    return %arg0, %c0_i32 : i32, i32
  }
}

</mosaic_0001>

<llo_original>
// kernel: tpu_custom_call.1
$region0: #{tpu_custom_call.1}
  #allocation0 [shape = 'u32[]', space=smem, size = 0x4, offset = 0x4, fixed_abs, tag = 'smem constant byte address 0x4 - core index']
  #allocation1 [shape = 'u32[72,128]{1,0:T(1,128)}', space=vmem, size = 0x9000, scoped, tag = 'internal scratch']
  %s0 = inlined_call_operand.vmem [shape: f32[2,16], index: 0, kind: input, shape index: {}]
  %s1 = inlined_call_operand.vmem [shape: bf16[16,512], index: 1, kind: input, shape index: {}]
  %s2 = inlined_call_operand.vmem [shape: f32[1,512], index: 2, kind: input, shape index: {}]
  %s3 = inlined_call_operand.vmem [shape: bf16[512,256], index: 3, kind: input, shape index: {}]
  %s4 = inlined_call_operand.vmem [shape: f32[1,256], index: 4, kind: input, shape index: {}]
  %s5 = inlined_call_operand.hbm [shape: f32[256,256], index: 5, kind: input, shape index: {}]
  %s6 = inlined_call_operand.vmem [shape: f32[1,256], index: 6, kind: input, shape index: {}]
  %s7 = inlined_call_operand.vmem [shape: f32[128,51], index: 7, kind: input, shape index: {}]
  %s8 = inlined_call_operand.vmem [shape: f32[1,51], index: 8, kind: input, shape index: {}]
  %s9 = inlined_call_operand.vmem [shape: f32[128,204], index: 9, kind: input, shape index: {}]
  %s10 = inlined_call_operand.vmem [shape: f32[1,204], index: 10, kind: input, shape index: {}]
  %s11 = inlined_call_operand.hbm [shape: f32[2,204], index: 11, kind: output, shape index: {}]
  %s12 = sld [smem:[#allocation0]]
  $region58: #{tpu_custom_call.1} parent=0
    _
  %s14 = ssub.s32 1, %s12
  %s15 = scalar_select 0, %s14, %s12
  $region1: #{tpu_custom_call.1} parent=0
    #allocation2 [shape = 'u8[262144]{0}', space=vmem, size = 0x40000, scoped, tag = 'input window, operand 5, single buffered']
    #allocation3 [shape = 's32[1]{0}', space=sflag, size = 0x4, scoped, tag = 'scoped memory for tpu_custom_call.1']
    #allocation4 [shape = 's32[1]{0}', space=sflag, size = 0x4, scoped, tag = 'scoped memory for tpu_custom_call.1']
    #allocation5 [shape = 'u8[2048]{0}', space=vmem, size = 0x800, scoped, tag = 'output window, operand 0, single buffered']
    %16 = vsyncpa [#allocation3], 0
    %17 = vsyncpa [#allocation4], 0
    // Predicated region
    $region2: #{tpu_custom_call.1} parent=1 // pred_check
      _
    $region3: #{tpu_custom_call.1} parent=1 // pred_check_branch
      %19 = sbr.rel (0) target = $region5
    $region4: #{tpu_custom_call.1} parent=1 // pred_region
      _
    $region5: #{tpu_custom_call.1} parent=1 // pred_fallthru
      _
    // Predicated region
    $region6: #{tpu_custom_call.1} parent=1 // pred_check
      _
    $region7: #{tpu_custom_call.1} parent=1 // pred_check_branch
      %21 = sbr.rel (0) target = $region9
    $region8: #{tpu_custom_call.1} parent=1 // pred_region
      _
    $region9: #{tpu_custom_call.1} parent=1 // pred_fallthru
      _
    // Predicated region
    $region10: #{tpu_custom_call.1} parent=1 // pred_check
      _
    $region11: #{tpu_custom_call.1} parent=1 // pred_check_branch
      %23 = sbr.rel (0) target = $region13
    $region12: #{tpu_custom_call.1} parent=1 // pred_region
      _
    $region13: #{tpu_custom_call.1} parent=1 // pred_fallthru
      _
    // Predicated region
    $region14: #{tpu_custom_call.1} parent=1 // pred_check
      _
    $region15: #{tpu_custom_call.1} parent=1 // pred_check_branch
      %25 = sbr.rel (0) target = $region17
    $region16: #{tpu_custom_call.1} parent=1 // pred_region
      _
    $region17: #{tpu_custom_call.1} parent=1 // pred_fallthru
      _
    // Predicated region
    $region18: #{tpu_custom_call.1} parent=1 // pred_check
      _
    $region19: #{tpu_custom_call.1} parent=1 // pred_check_branch
      %27 = sbr.rel (0) target = $region21
    $region20: #{tpu_custom_call.1} parent=1 // pred_region
      _
    $region21: #{tpu_custom_call.1} parent=1 // pred_fallthru
      _
    // Predicated region
    $region22: #{tpu_custom_call.1} parent=1 // pred_check
      _
    $region23: #{tpu_custom_call.1} parent=1 // pred_check_branch
      %29 = sbr.rel (0) target = $region25
    $region24: #{tpu_custom_call.1} parent=1 // pred_region
      %31 = vsyncadd [#allocation3], 0
      %s32 = sshll.u32 %s5, 4
      %s33 = int_to_ptr.hbm [resolvable:$true] %s32
      %s34 = sshll.u32 [#allocation2], 4
      %s35 = int_to_ptr.vmem [resolvable:$true] %s34
      %40 = dma.hbm_to_vmem [thread:$0]  %s33, 8192, %s35, [#allocation3], 256, 256, 16
    $region25: #{tpu_custom_call.1} parent=1 // pred_fallthru
      _
    // Predicated region
    $region26: #{tpu_custom_call.1} parent=1 // pred_check
      _
    $region27: #{tpu_custom_call.1} parent=1 // pred_check_branch
      %42 = sbr.rel (0) target = $region29
    $region28: #{tpu_custom_call.1} parent=1 // pred_region
      _
    $region29: #{tpu_custom_call.1} parent=1 // pred_fallthru
      _
    // Predicated region
    $region30: #{tpu_custom_call.1} parent=1 // pred_check
      _
    $region31: #{tpu_custom_call.1} parent=1 // pred_check_branch
      %44 = sbr.rel (0) target = $region33
    $region32: #{tpu_custom_call.1} parent=1 // pred_region
      _
    $region33: #{tpu_custom_call.1} parent=1 // pred_fallthru
      _
    // Predicated region
    $region34: #{tpu_custom_call.1} parent=1 // pred_check
      _
    $region35: #{tpu_custom_call.1} parent=1 // pred_check_branch
      %46 = sbr.rel (0) target = $region37
    $region36: #{tpu_custom_call.1} parent=1 // pred_region
      _
    $region37: #{tpu_custom_call.1} parent=1 // pred_fallthru
      _
    // Predicated region
    $region38: #{tpu_custom_call.1} parent=1 // pred_check
      _
    $region39: #{tpu_custom_call.1} parent=1 // pred_check_branch
      %48 = sbr.rel (0) target = $region41
    $region40: #{tpu_custom_call.1} parent=1 // pred_region
      _
    $region41: #{tpu_custom_call.1} parent=1 // pred_fallthru
      _
    // Predicated region
    $region42: #{tpu_custom_call.1} parent=1 // pred_check
      _
    $region43: #{tpu_custom_call.1} parent=1 // pred_check_branch
      %50 = sbr.rel (0) target = $region45
    $region44: #{tpu_custom_call.1} parent=1 // pred_region
      _
    $region45: #{tpu_custom_call.1} parent=1 // pred_fallthru
      _
    // Predicated region
    $region46: #{tpu_custom_call.1} parent=1 // pred_check
      _
    $region47: #{tpu_custom_call.1} parent=1 // pred_check_branch
      %52 = sbr.rel (0) target = $region49
    $region48: #{tpu_custom_call.1} parent=1 // pred_region
      %54 = dma.done [#allocation3], 8192
    $region49: #{tpu_custom_call.1} parent=1 // pred_fallthru
      _
    %v55 = vld [vmem:[%s0] sm:$0x3]
    %v56 = vld [vmem:[%s1] sm:$0xff]
    %v57 = vld [vmem:[%s1 + $0x8] sm:$0xff]
    %v58 = vld [vmem:[%s1 + $0x10] sm:$0xff]
    %v59 = vld [vmem:[%s1 + $0x18] sm:$0xff]
    %v60 = vunpack.c.l.bf16 %v56
    %v61 = vunpack.c.h.bf16 %v56
    %v62 = vunpack.c.l.bf16 %v57
    %v63 = vunpack.c.h.bf16 %v57
    %v64 = vunpack.c.l.bf16 %v58
    %v65 = vunpack.c.h.bf16 %v58
    %v66 = vunpack.c.l.bf16 %v59
    %v67 = vunpack.c.h.bf16 %v59
    %v68 = vld [vmem:[%s3] sm:$0xff]
    %v69 = vld [vmem:[%s3 + $0x8] sm:$0xff]
    %v70 = vld [vmem:[%s3 + $0x10] sm:$0xff]
    %v71 = vld [vmem:[%s3 + $0x18] sm:$0xff]
    %v72 = vld [vmem:[%s3 + $0x20] sm:$0xff]
    %v73 = vld [vmem:[%s3 + $0x28] sm:$0xff]
    %v74 = vld [vmem:[%s3 + $0x30] sm:$0xff]
    %v75 = vld [vmem:[%s3 + $0x38] sm:$0xff]
    %v76 = vld [vmem:[%s3 + $0x40] sm:$0xff]
    %v77 = vld [vmem:[%s3 + $0x48] sm:$0xff]
    %v78 = vld [vmem:[%s3 + $0x50] sm:$0xff]
    %v79 = vld [vmem:[%s3 + $0x58] sm:$0xff]
    %v80 = vld [vmem:[%s3 + $0x60] sm:$0xff]
    %v81 = vld [vmem:[%s3 + $0x68] sm:$0xff]
    %v82 = vld [vmem:[%s3 + $0x70] sm:$0xff]
    %v83 = vld [vmem:[%s3 + $0x78] sm:$0xff]
    %v84 = vld [vmem:[%s3 + $0x80] sm:$0xff]
    %v85 = vld [vmem:[%s3 + $0x88] sm:$0xff]
    %v86 = vld [vmem:[%s3 + $0x90] sm:$0xff]
    %v87 = vld [vmem:[%s3 + $0x98] sm:$0xff]
    %v88 = vld [vmem:[%s3 + $0xa0] sm:$0xff]
    %v89 = vld [vmem:[%s3 + $0xa8] sm:$0xff]
    %v90 = vld [vmem:[%s3 + $0xb0] sm:$0xff]
    %v91 = vld [vmem:[%s3 + $0xb8] sm:$0xff]
    %v92 = vld [vmem:[%s3 + $0xc0] sm:$0xff]
    %v93 = vld [vmem:[%s3 + $0xc8] sm:$0xff]
    %v94 = vld [vmem:[%s3 + $0xd0] sm:$0xff]
    %v95 = vld [vmem:[%s3 + $0xd8] sm:$0xff]
    %v96 = vld [vmem:[%s3 + $0xe0] sm:$0xff]
    %v97 = vld [vmem:[%s3 + $0xe8] sm:$0xff]
    %v98 = vld [vmem:[%s3 + $0xf0] sm:$0xff]
    %v99 = vld [vmem:[%s3 + $0xf8] sm:$0xff]
    %v100 = vld [vmem:[%s3 + $0x100] sm:$0xff]
    %v101 = vld [vmem:[%s3 + $0x108] sm:$0xff]
    %v102 = vld [vmem:[%s3 + $0x110] sm:$0xff]
    %v103 = vld [vmem:[%s3 + $0x118] sm:$0xff]
    %v104 = vld [vmem:[%s3 + $0x120] sm:$0xff]
    %v105 = vld [vmem:[%s3 + $0x128] sm:$0xff]
    %v106 = vld [vmem:[%s3 + $0x130] sm:$0xff]
    %v107 = vld [vmem:[%s3 + $0x138] sm:$0xff]
    %v108 = vld [vmem:[%s3 + $0x140] sm:$0xff]
    %v109 = vld [vmem:[%s3 + $0x148] sm:$0xff]
    %v110 = vld [vmem:[%s3 + $0x150] sm:$0xff]
    %v111 = vld [vmem:[%s3 + $0x158] sm:$0xff]
    %v112 = vld [vmem:[%s3 + $0x160] sm:$0xff]
    %v113 = vld [vmem:[%s3 + $0x168] sm:$0xff]
    %v114 = vld [vmem:[%s3 + $0x170] sm:$0xff]
    %v115 = vld [vmem:[%s3 + $0x178] sm:$0xff]
    %v116 = vld [vmem:[%s3 + $0x180] sm:$0xff]
    %v117 = vld [vmem:[%s3 + $0x188] sm:$0xff]
    %v118 = vld [vmem:[%s3 + $0x190] sm:$0xff]
    %v119 = vld [vmem:[%s3 + $0x198] sm:$0xff]
    %v120 = vld [vmem:[%s3 + $0x1a0] sm:$0xff]
    %v121 = vld [vmem:[%s3 + $0x1a8] sm:$0xff]
    %v122 = vld [vmem:[%s3 + $0x1b0] sm:$0xff]
    %v123 = vld [vmem:[%s3 + $0x1b8] sm:$0xff]
    %v124 = vld [vmem:[%s3 + $0x1c0] sm:$0xff]
    %v125 = vld [vmem:[%s3 + $0x1c8] sm:$0xff]
    %v126 = vld [vmem:[%s3 + $0x1d0] sm:$0xff]
    %v127 = vld [vmem:[%s3 + $0x1d8] sm:$0xff]
    %v128 = vld [vmem:[%s3 + $0x1e0] sm:$0xff]
    %v129 = vld [vmem:[%s3 + $0x1e8] sm:$0xff]
    %v130 = vld [vmem:[%s3 + $0x1f0] sm:$0xff]
    %v131 = vld [vmem:[%s3 + $0x1f8] sm:$0xff]
    %v132 = vunpack.c.l.bf16 %v68
    %v133 = vunpack.c.h.bf16 %v68
    %v134 = vunpack.c.l.bf16 %v69
    %v135 = vunpack.c.h.bf16 %v69
    %v136 = vunpack.c.l.bf16 %v70
    %v137 = vunpack.c.h.bf16 %v70
    %v138 = vunpack.c.l.bf16 %v71
    %v139 = vunpack.c.h.bf16 %v71
    %v140 = vunpack.c.l.bf16 %v72
    %v141 = vunpack.c.h.bf16 %v72
    %v142 = vunpack.c.l.bf16 %v73
    %v143 = vunpack.c.h.bf16 %v73
    %v144 = vunpack.c.l.bf16 %v74
    %v145 = vunpack.c.h.bf16 %v74
    %v146 = vunpack.c.l.bf16 %v75
    %v147 = vunpack.c.h.bf16 %v75
    %v148 = vunpack.c.l.bf16 %v76
    %v149 = vunpack.c.h.bf16 %v76
    %v150 = vunpack.c.l.bf16 %v77
    %v151 = vunpack.c.h.bf16 %v77
    %v152 = vunpack.c.l.bf16 %v78
    %v153 = vunpack.c.h.bf16 %v78
    %v154 = vunpack.c.l.bf16 %v79
    %v155 = vunpack.c.h.bf16 %v79
    %v156 = vunpack.c.l.bf16 %v80
    %v157 = vunpack.c.h.bf16 %v80
    %v158 = vunpack.c.l.bf16 %v81
    %v159 = vunpack.c.h.bf16 %v81
    %v160 = vunpack.c.l.bf16 %v82
    %v161 = vunpack.c.h.bf16 %v82
    %v162 = vunpack.c.l.bf16 %v83
    %v163 = vunpack.c.h.bf16 %v83
    %v164 = vunpack.c.l.bf16 %v84
    %v165 = vunpack.c.h.bf16 %v84
    %v166 = vunpack.c.l.bf16 %v85
    %v167 = vunpack.c.h.bf16 %v85
    %v168 = vunpack.c.l.bf16 %v86
    %v169 = vunpack.c.h.bf16 %v86
    %v170 = vunpack.c.l.bf16 %v87
    %v171 = vunpack.c.h.bf16 %v87
    %v172 = vunpack.c.l.bf16 %v88
    %v173 = vunpack.c.h.bf16 %v88
    %v174 = vunpack.c.l.bf16 %v89
    %v175 = vunpack.c.h.bf16 %v89
    %v176 = vunpack.c.l.bf16 %v90
    %v177 = vunpack.c.h.bf16 %v90
    %v178 = vunpack.c.l.bf16 %v91
    %v179 = vunpack.c.h.bf16 %v91
    %v180 = vunpack.c.l.bf16 %v92
    %v181 = vunpack.c.h.bf16 %v92
    %v182 = vunpack.c.l.bf16 %v93
    %v183 = vunpack.c.h.bf16 %v93
    %v184 = vunpack.c.l.bf16 %v94
    %v185 = vunpack.c.h.bf16 %v94
    %v186 = vunpack.c.l.bf16 %v95
    %v187 = vunpack.c.h.bf16 %v95
    %v188 = vunpack.c.l.bf16 %v96
    %v189 = vunpack.c.h.bf16 %v96
    %v190 = vunpack.c.l.bf16 %v97
    %v191 = vunpack.c.h.bf16 %v97
    %v192 = vunpack.c.l.bf16 %v98
    %v193 = vunpack.c.h.bf16 %v98
    %v194 = vunpack.c.l.bf16 %v99
    %v195 = vunpack.c.h.bf16 %v99
    %v196 = vunpack.c.l.bf16 %v100
    %v197 = vunpack.c.h.bf16 %v100
    %v198 = vunpack.c.l.bf16 %v101
    %v199 = vunpack.c.h.bf16 %v101
    %v200 = vunpack.c.l.bf16 %v102
    %v201 = vunpack.c.h.bf16 %v102
    %v202 = vunpack.c.l.bf16 %v103
    %v203 = vunpack.c.h.bf16 %v103
    %v204 = vunpack.c.l.bf16 %v104
    %v205 = vunpack.c.h.bf16 %v104
    %v206 = vunpack.c.l.bf16 %v105
    %v207 = vunpack.c.h.bf16 %v105
    %v208 = vunpack.c.l.bf16 %v106
    %v209 = vunpack.c.h.bf16 %v106
    %v210 = vunpack.c.l.bf16 %v107
    %v211 = vunpack.c.h.bf16 %v107
    %v212 = vunpack.c.l.bf16 %v108
    %v213 = vunpack.c.h.bf16 %v108
    %v214 = vunpack.c.l.bf16 %v109
    %v215 = vunpack.c.h.bf16 %v109
    %v216 = vunpack.c.l.bf16 %v110
    %v217 = vunpack.c.h.bf16 %v110
    %v218 = vunpack.c.l.bf16 %v111
    %v219 = vunpack.c.h.bf16 %v111
    %v220 = vunpack.c.l.bf16 %v112
    %v221 = vunpack.c.h.bf16 %v112
    %v222 = vunpack.c.l.bf16 %v113
    %v223 = vunpack.c.h.bf16 %v113
    %v224 = vunpack.c.l.bf16 %v114
    %v225 = vunpack.c.h.bf16 %v114
    %v226 = vunpack.c.l.bf16 %v115
    %v227 = vunpack.c.h.bf16 %v115
    %v228 = vunpack.c.l.bf16 %v116
    %v229 = vunpack.c.h.bf16 %v116
    %v230 = vunpack.c.l.bf16 %v117
    %v231 = vunpack.c.h.bf16 %v117
    %v232 = vunpack.c.l.bf16 %v118
    %v233 = vunpack.c.h.bf16 %v118
    %v234 = vunpack.c.l.bf16 %v119
    %v235 = vunpack.c.h.bf16 %v119
    %v236 = vunpack.c.l.bf16 %v120
    %v237 = vunpack.c.h.bf16 %v120
    %v238 = vunpack.c.l.bf16 %v121
    %v239 = vunpack.c.h.bf16 %v121
    %v240 = vunpack.c.l.bf16 %v122
    %v241 = vunpack.c.h.bf16 %v122
    %v242 = vunpack.c.l.bf16 %v123
    %v243 = vunpack.c.h.bf16 %v123
    %v244 = vunpack.c.l.bf16 %v124
    %v245 = vunpack.c.h.bf16 %v124
    %v246 = vunpack.c.l.bf16 %v125
    %v247 = vunpack.c.h.bf16 %v125
    %v248 = vunpack.c.l.bf16 %v126
    %v249 = vunpack.c.h.bf16 %v126
    %v250 = vunpack.c.l.bf16 %v127
    %v251 = vunpack.c.h.bf16 %v127
    %v252 = vunpack.c.l.bf16 %v128
    %v253 = vunpack.c.h.bf16 %v128
    %v254 = vunpack.c.l.bf16 %v129
    %v255 = vunpack.c.h.bf16 %v129
    %v256 = vunpack.c.l.bf16 %v130
    %v257 = vunpack.c.h.bf16 %v130
    %v258 = vunpack.c.l.bf16 %v131
    %v259 = vunpack.c.h.bf16 %v131
    %v260 = vld [vmem:[%s2] sm:$0xf]
    %v262 = vperm.slane %v260, 0
    %v263 = vperm.slane %v260, 1
    %v264 = vperm.slane %v260, 2
    %v265 = vperm.slane %v260, 3
    %vm270 = vcmask 130048
    %v272 = vsel %vm270, %v55, 0
    %274 = vmatpush.msra.mxu0 0.0
    %275 = vmatpush.msra.mxu0 0.0
    %276 = vmatpush.msra.mxu0 0.0
    %277 = vmatpush.msra.mxu0 0.0
    %278 = vmatpush.msra.mxu0 0.0
    %279 = vmatpush.msra.mxu0 0.0
    %280 = vmatpush.msra.mxu0 0.0
    %281 = vmatpush.msra.mxu0 0.0
    %282 = vmatpush.msra.mxu0 0.0
    %283 = vmatpush.msra.mxu0 0.0
    %284 = vmatpush.msra.mxu0 0.0
    %285 = vmatpush.msra.mxu0 0.0
    %286 = vmatpush.msra.mxu0 0.0
    %287 = vmatpush.msra.mxu0 0.0
    %288 = vmatpush.msra.mxu0 %v64
    %289 = vmatpush.msra.mxu0 %v60
    %290 = vmatmul.f32.gmra.mxu0 %v272
    %v291 = vpop.f32.mrf.mxu0
    %v292 = vadd.f32 %v262, %v291
    %293 = vdwg.mxu0
    %294 = vmatpush.msra.mxu0 0.0
    %295 = vmatpush.msra.mxu0 0.0
    %296 = vmatpush.msra.mxu0 0.0
    %297 = vmatpush.msra.mxu0 0.0
    %298 = vmatpush.msra.mxu0 0.0
    %299 = vmatpush.msra.mxu0 0.0
    %300 = vmatpush.msra.mxu0 0.0
    %301 = vmatpush.msra.mxu0 0.0
    %302 = vmatpush.msra.mxu0 0.0
    %303 = vmatpush.msra.mxu0 0.0
    %304 = vmatpush.msra.mxu0 0.0
    %305 = vmatpush.msra.mxu0 0.0
    %306 = vmatpush.msra.mxu0 0.0
    %307 = vmatpush.msra.mxu0 0.0
    %308 = vmatpush.msra.mxu0 %v65
    %309 = vmatpush.msra.mxu0 %v61
    %310 = vmatmul.f32.gmra.mxu0 %v272
    %v311 = vpop.f32.mrf.mxu0
    %v312 = vadd.f32 %v263, %v311
    %313 = vdwg.mxu0
    %314 = vmatpush.msra.mxu0 0.0
    %315 = vmatpush.msra.mxu0 0.0
    %316 = vmatpush.msra.mxu0 0.0
    %317 = vmatpush.msra.mxu0 0.0
    %318 = vmatpush.msra.mxu0 0.0
    %319 = vmatpush.msra.mxu0 0.0
    %320 = vmatpush.msra.mxu0 0.0
    %321 = vmatpush.msra.mxu0 0.0
    %322 = vmatpush.msra.mxu0 0.0
    %323 = vmatpush.msra.mxu0 0.0
    %324 = vmatpush.msra.mxu0 0.0
    %325 = vmatpush.msra.mxu0 0.0
    %326 = vmatpush.msra.mxu0 0.0
    %327 = vmatpush.msra.mxu0 0.0
    %328 = vmatpush.msra.mxu0 %v66
    %329 = vmatpush.msra.mxu0 %v62
    %330 = vmatmul.f32.gmra.mxu0 %v272
    %v331 = vpop.f32.mrf.mxu0
    %v332 = vadd.f32 %v264, %v331
    %333 = vdwg.mxu0
    %334 = vmatpush.msra.mxu0 0.0
    %335 = vmatpush.msra.mxu0 0.0
    %336 = vmatpush.msra.mxu0 0.0
    %337 = vmatpush.msra.mxu0 0.0
    %338 = vmatpush.msra.mxu0 0.0
    %339 = vmatpush.msra.mxu0 0.0
    %340 = vmatpush.msra.mxu0 0.0
    %341 = vmatpush.msra.mxu0 0.0
    %342 = vmatpush.msra.mxu0 0.0
    %343 = vmatpush.msra.mxu0 0.0
    %344 = vmatpush.msra.mxu0 0.0
    %345 = vmatpush.msra.mxu0 0.0
    %346 = vmatpush.msra.mxu0 0.0
    %347 = vmatpush.msra.mxu0 0.0
    %348 = vmatpush.msra.mxu0 %v67
    %349 = vmatpush.msra.mxu0 %v63
    %350 = vmatmul.f32.gmra.mxu0 %v272
    %v351 = vpop.f32.mrf.mxu0
    %v352 = vadd.f32 %v265, %v351
    %353 = vdwg.mxu0
    %v354 = vmax.f32 %v292, 0.0
    %v355 = vmax.f32 %v312, 0.0
    %v356 = vmax.f32 %v332, 0.0
    %v357 = vmax.f32 %v352, 0.0
    %v358 = vld [vmem:[%s4] sm:$0x3]
    %v360 = vperm.slane %v358, 0
    %v361 = vperm.slane %v358, 1
    %364 = vmatpush.msra.mxu0 %v162
    %365 = vmatpush.msra.mxu0 %v160
    %366 = vmatpush.msra.mxu0 %v158
    %367 = vmatpush.msra.mxu0 %v156
    %368 = vmatpush.msra.mxu0 %v154
    %369 = vmatpush.msra.mxu0 %v152
    %370 = vmatpush.msra.mxu0 %v150
    %371 = vmatpush.msra.mxu0 %v148
    %372 = vmatpush.msra.mxu0 %v146
    %373 = vmatpush.msra.mxu0 %v144
    %374 = vmatpush.msra.mxu0 %v142
    %375 = vmatpush.msra.mxu0 %v140
    %376 = vmatpush.msra.mxu0 %v138
    %377 = vmatpush.msra.mxu0 %v136
    %378 = vmatpush.msra.mxu0 %v134
    %379 = vmatpush.msra.mxu0 %v132
    %380 = vmatmul.f32.gmra.mxu0 %v354
    %v381 = vpop.f32.mrf.mxu0
    %v382 = vadd.f32 %v360, %v381
    %383 = vdwg.mxu0
    %384 = vmatpush.msra.mxu0 %v194
    %385 = vmatpush.msra.mxu0 %v192
    %386 = vmatpush.msra.mxu0 %v190
    %387 = vmatpush.msra.mxu0 %v188
    %388 = vmatpush.msra.mxu0 %v186
    %389 = vmatpush.msra.mxu0 %v184
    %390 = vmatpush.msra.mxu0 %v182
    %391 = vmatpush.msra.mxu0 %v180
    %392 = vmatpush.msra.mxu0 %v178
    %393 = vmatpush.msra.mxu0 %v176
    %394 = vmatpush.msra.mxu0 %v174
    %395 = vmatpush.msra.mxu0 %v172
    %396 = vmatpush.msra.mxu0 %v170
    %397 = vmatpush.msra.mxu0 %v168
    %398 = vmatpush.msra.mxu0 %v166
    %399 = vmatpush.msra.mxu0 %v164
    %400 = vmatmul.f32.gmra.mxu0 %v355
    %v401 = vpop.f32.mrf.mxu0
    %v402 = vadd.f32 %v382, %v401
    %403 = vdwg.mxu0
    %404 = vmatpush.msra.mxu0 %v226
    %405 = vmatpush.msra.mxu0 %v224
    %406 = vmatpush.msra.mxu0 %v222
    %407 = vmatpush.msra.mxu0 %v220
    %408 = vmatpush.msra.mxu0 %v218
    %409 = vmatpush.msra.mxu0 %v216
    %410 = vmatpush.msra.mxu0 %v214
    %411 = vmatpush.msra.mxu0 %v212
    %412 = vmatpush.msra.mxu0 %v210
    %413 = vmatpush.msra.mxu0 %v208
    %414 = vmatpush.msra.mxu0 %v206
    %415 = vmatpush.msra.mxu0 %v204
    %416 = vmatpush.msra.mxu0 %v202
    %417 = vmatpush.msra.mxu0 %v200
    %418 = vmatpush.msra.mxu0 %v198
    %419 = vmatpush.msra.mxu0 %v196
    %420 = vmatmul.f32.gmra.mxu0 %v356
    %v421 = vpop.f32.mrf.mxu0
    %v422 = vadd.f32 %v402, %v421
    %423 = vdwg.mxu0
    %424 = vmatpush.msra.mxu0 %v258
    %425 = vmatpush.msra.mxu0 %v256
    %426 = vmatpush.msra.mxu0 %v254
    %427 = vmatpush.msra.mxu0 %v252
    %428 = vmatpush.msra.mxu0 %v250
    %429 = vmatpush.msra.mxu0 %v248
    %430 = vmatpush.msra.mxu0 %v246
    %431 = vmatpush.msra.mxu0 %v244
    %432 = vmatpush.msra.mxu0 %v242
    %433 = vmatpush.msra.mxu0 %v240
    %434 = vmatpush.msra.mxu0 %v238
    %435 = vmatpush.msra.mxu0 %v236
    %436 = vmatpush.msra.mxu0 %v234
    %437 = vmatpush.msra.mxu0 %v232
    %438 = vmatpush.msra.mxu0 %v230
    %439 = vmatpush.msra.mxu0 %v228
    %440 = vmatmul.f32.gmra.mxu0 %v357
    %v441 = vpop.f32.mrf.mxu0
    %v442 = vadd.f32 %v422, %v441
    %443 = vdwg.mxu0
    %444 = vmatpush.msra.mxu0 %v163
    %445 = vmatpush.msra.mxu0 %v161
    %446 = vmatpush.msra.mxu0 %v159
    %447 = vmatpush.msra.mxu0 %v157
    %448 = vmatpush.msra.mxu0 %v155
    %449 = vmatpush.msra.mxu0 %v153
    %450 = vmatpush.msra.mxu0 %v151
    %451 = vmatpush.msra.mxu0 %v149
    %452 = vmatpush.msra.mxu0 %v147
    %453 = vmatpush.msra.mxu0 %v145
    %454 = vmatpush.msra.mxu0 %v143
    %455 = vmatpush.msra.mxu0 %v141
    %456 = vmatpush.msra.mxu0 %v139
    %457 = vmatpush.msra.mxu0 %v137
    %458 = vmatpush.msra.mxu0 %v135
    %459 = vmatpush.msra.mxu0 %v133
    %460 = vmatmul.f32.gmra.mxu0 %v354
    %v461 = vpop.f32.mrf.mxu0
    %v462 = vadd.f32 %v361, %v461
    %463 = vdwg.mxu0
    %464 = vmatpush.msra.mxu0 %v195
    %465 = vmatpush.msra.mxu0 %v193
    %466 = vmatpush.msra.mxu0 %v191
    %467 = vmatpush.msra.mxu0 %v189
    %468 = vmatpush.msra.mxu0 %v187
    %469 = vmatpush.msra.mxu0 %v185
    %470 = vmatpush.msra.mxu0 %v183
    %471 = vmatpush.msra.mxu0 %v181
    %472 = vmatpush.msra.mxu0 %v179
    %473 = vmatpush.msra.mxu0 %v177
    %474 = vmatpush.msra.mxu0 %v175
    %475 = vmatpush.msra.mxu0 %v173
    %476 = vmatpush.msra.mxu0 %v171
    %477 = vmatpush.msra.mxu0 %v169
    %478 = vmatpush.msra.mxu0 %v167
    %479 = vmatpush.msra.mxu0 %v165
    %480 = vmatmul.f32.gmra.mxu0 %v355
    %v481 = vpop.f32.mrf.mxu0
    %v482 = vadd.f32 %v462, %v481
    %483 = vdwg.mxu0
    %484 = vmatpush.msra.mxu0 %v227
    %485 = vmatpush.msra.mxu0 %v225
    %486 = vmatpush.msra.mxu0 %v223
    %487 = vmatpush.msra.mxu0 %v221
    %488 = vmatpush.msra.mxu0 %v219
    %489 = vmatpush.msra.mxu0 %v217
    %490 = vmatpush.msra.mxu0 %v215
    %491 = vmatpush.msra.mxu0 %v213
    %492 = vmatpush.msra.mxu0 %v211
    %493 = vmatpush.msra.mxu0 %v209
    %494 = vmatpush.msra.mxu0 %v207
    %495 = vmatpush.msra.mxu0 %v205
    %496 = vmatpush.msra.mxu0 %v203
    %497 = vmatpush.msra.mxu0 %v201
    %498 = vmatpush.msra.mxu0 %v199
    %499 = vmatpush.msra.mxu0 %v197
    %500 = vmatmul.f32.gmra.mxu0 %v356
    %v501 = vpop.f32.mrf.mxu0
    %v502 = vadd.f32 %v482, %v501
    %503 = vdwg.mxu0
    %504 = vmatpush.msra.mxu0 %v259
    %505 = vmatpush.msra.mxu0 %v257
    %506 = vmatpush.msra.mxu0 %v255
    %507 = vmatpush.msra.mxu0 %v253
    %508 = vmatpush.msra.mxu0 %v251
    %509 = vmatpush.msra.mxu0 %v249
    %510 = vmatpush.msra.mxu0 %v247
    %511 = vmatpush.msra.mxu0 %v245
    %512 = vmatpush.msra.mxu0 %v243
    %513 = vmatpush.msra.mxu0 %v241
    %514 = vmatpush.msra.mxu0 %v239
    %515 = vmatpush.msra.mxu0 %v237
    %516 = vmatpush.msra.mxu0 %v235
    %517 = vmatpush.msra.mxu0 %v233
    %518 = vmatpush.msra.mxu0 %v231
    %519 = vmatpush.msra.mxu0 %v229
    %520 = vmatmul.f32.gmra.mxu0 %v357
    %v521 = vpop.f32.mrf.mxu0
    %v522 = vadd.f32 %v502, %v521
    %523 = vdwg.mxu0
    %v524 = vmax.f32 %v442, 0.0
    %v525 = vmax.f32 %v522, 0.0
    %v526 = vld [vmem:[#allocation2] sm:$0xff]
    %v527 = vld [vmem:[#allocation2 + $0x8] sm:$0xff]
    %v528 = vld [vmem:[#allocation2 + $0x10] sm:$0xff]
    %v529 = vld [vmem:[#allocation2 + $0x18] sm:$0xff]
    %v530 = vld [vmem:[#allocation2 + $0x20] sm:$0xff]
    %v531 = vld [vmem:[#allocation2 + $0x28] sm:$0xff]
    %v532 = vld [vmem:[#allocation2 + $0x30] sm:$0xff]
    %v533 = vld [vmem:[#allocation2 + $0x38] sm:$0xff]
    %v534 = vld [vmem:[#allocation2 + $0x40] sm:$0xff]
    %v535 = vld [vmem:[#allocation2 + $0x48] sm:$0xff]
    %v536 = vld [vmem:[#allocation2 + $0x50] sm:$0xff]
    %v537 = vld [vmem:[#allocation2 + $0x58] sm:$0xff]
    %v538 = vld [vmem:[#allocation2 + $0x60] sm:$0xff]
    %v539 = vld [vmem:[#allocation2 + $0x68] sm:$0xff]
    %v540 = vld [vmem:[#allocation2 + $0x70] sm:$0xff]
    %v541 = vld [vmem:[#allocation2 + $0x78] sm:$0xff]
    %v542 = vld [vmem:[#allocation2 + $0x80] sm:$0xff]
    %v543 = vld [vmem:[#allocation2 + $0x88] sm:$0xff]
    %v544 = vld [vmem:[#allocation2 + $0x90] sm:$0xff]
    %v545 = vld [vmem:[#allocation2 + $0x98] sm:$0xff]
    %v546 = vld [vmem:[#allocation2 + $0xa0] sm:$0xff]
    %v547 = vld [vmem:[#allocation2 + $0xa8] sm:$0xff]
    %v548 = vld [vmem:[#allocation2 + $0xb0] sm:$0xff]
    %v549 = vld [vmem:[#allocation2 + $0xb8] sm:$0xff]
    %v550 = vld [vmem:[#allocation2 + $0xc0] sm:$0xff]
    %v551 = vld [vmem:[#allocation2 + $0xc8] sm:$0xff]
    %v552 = vld [vmem:[#allocation2 + $0xd0] sm:$0xff]
    %v553 = vld [vmem:[#allocation2 + $0xd8] sm:$0xff]
    %v554 = vld [vmem:[#allocation2 + $0xe0] sm:$0xff]
    %v555 = vld [vmem:[#allocation2 + $0xe8] sm:$0xff]
    %v556 = vld [vmem:[#allocation2 + $0xf0] sm:$0xff]
    %v557 = vld [vmem:[#allocation2 + $0xf8] sm:$0xff]
    %v558 = vld [vmem:[#allocation2 + $0x100] sm:$0xff]
    %v559 = vld [vmem:[#allocation2 + $0x108] sm:$0xff]
    %v560 = vld [vmem:[#allocation2 + $0x110] sm:$0xff]
    %v561 = vld [vmem:[#allocation2 + $0x118] sm:$0xff]
    %v562 = vld [vmem:[#allocation2 + $0x120] sm:$0xff]
    %v563 = vld [vmem:[#allocation2 + $0x128] sm:$0xff]
    %v564 = vld [vmem:[#allocation2 + $0x130] sm:$0xff]
    %v565 = vld [vmem:[#allocation2 + $0x138] sm:$0xff]
    %v566 = vld [vmem:[#allocation2 + $0x140] sm:$0xff]
    %v567 = vld [vmem:[#allocation2 + $0x148] sm:$0xff]
    %v568 = vld [vmem:[#allocation2 + $0x150] sm:$0xff]
    %v569 = vld [vmem:[#allocation2 + $0x158] sm:$0xff]
    %v570 = vld [vmem:[#allocation2 + $0x160] sm:$0xff]
    %v571 = vld [vmem:[#allocation2 + $0x168] sm:$0xff]
    %v572 = vld [vmem:[#allocation2 + $0x170] sm:$0xff]
    %v573 = vld [vmem:[#allocation2 + $0x178] sm:$0xff]
    %v574 = vld [vmem:[#allocation2 + $0x180] sm:$0xff]
    %v575 = vld [vmem:[#allocation2 + $0x188] sm:$0xff]
    %v576 = vld [vmem:[#allocation2 + $0x190] sm:$0xff]
    %v577 = vld [vmem:[#allocation2 + $0x198] sm:$0xff]
    %v578 = vld [vmem:[#allocation2 + $0x1a0] sm:$0xff]
    %v579 = vld [vmem:[#allocation2 + $0x1a8] sm:$0xff]
    %v580 = vld [vmem:[#allocation2 + $0x1b0] sm:$0xff]
    %v581 = vld [vmem:[#allocation2 + $0x1b8] sm:$0xff]
    %v582 = vld [vmem:[#allocation2 + $0x1c0] sm:$0xff]
    %v583 = vld [vmem:[#allocation2 + $0x1c8] sm:$0xff]
    %v584 = vld [vmem:[#allocation2 + $0x1d0] sm:$0xff]
    %v585 = vld [vmem:[#allocation2 + $0x1d8] sm:$0xff]
    %v586 = vld [vmem:[#allocation2 + $0x1e0] sm:$0xff]
    %v587 = vld [vmem:[#allocation2 + $0x1e8] sm:$0xff]
    %v588 = vld [vmem:[#allocation2 + $0x1f0] sm:$0xff]
    %v589 = vld [vmem:[#allocation2 + $0x1f8] sm:$0xff]
    %v590 = vld [vmem:[%s6] sm:$0x3]
    %v592 = vperm.slane %v590, 0
    %v593 = vperm.slane %v590, 1
    %596 = vmatpush.msra.mxu0 %v556
    %597 = vmatpush.msra.mxu0 %v554
    %598 = vmatpush.msra.mxu0 %v552
    %599 = vmatpush.msra.mxu0 %v550
    %600 = vmatpush.msra.mxu0 %v548
    %601 = vmatpush.msra.mxu0 %v546
    %602 = vmatpush.msra.mxu0 %v544
    %603 = vmatpush.msra.mxu0 %v542
    %604 = vmatpush.msra.mxu0 %v540
    %605 = vmatpush.msra.mxu0 %v538
    %606 = vmatpush.msra.mxu0 %v536
    %607 = vmatpush.msra.mxu0 %v534
    %608 = vmatpush.msra.mxu0 %v532
    %609 = vmatpush.msra.mxu0 %v530
    %610 = vmatpush.msra.mxu0 %v528
    %611 = vmatpush.msra.mxu0 %v526
    %612 = vmatmul.f32.gmra.mxu0 %v524
    %v613 = vpop.f32.mrf.mxu0
    %v614 = vadd.f32 %v592, %v613
    %615 = vdwg.mxu0
    %616 = vmatpush.msra.mxu0 %v588
    %617 = vmatpush.msra.mxu0 %v586
    %618 = vmatpush.msra.mxu0 %v584
    %619 = vmatpush.msra.mxu0 %v582
    %620 = vmatpush.msra.mxu0 %v580
    %621 = vmatpush.msra.mxu0 %v578
    %622 = vmatpush.msra.mxu0 %v576
    %623 = vmatpush.msra.mxu0 %v574
    %624 = vmatpush.msra.mxu0 %v572
    %625 = vmatpush.msra.mxu0 %v570
    %626 = vmatpush.msra.mxu0 %v568
    %627 = vmatpush.msra.mxu0 %v566
    %628 = vmatpush.msra.mxu0 %v564
    %629 = vmatpush.msra.mxu0 %v562
    %630 = vmatpush.msra.mxu0 %v560
    %631 = vmatpush.msra.mxu0 %v558
    %632 = vmatmul.f32.gmra.mxu0 %v525
    %v633 = vpop.f32.mrf.mxu0
    %v634 = vadd.f32 %v614, %v633
    %635 = vdwg.mxu0
    %636 = vmatpush.msra.mxu0 %v557
    %637 = vmatpush.msra.mxu0 %v555
    %638 = vmatpush.msra.mxu0 %v553
    %639 = vmatpush.msra.mxu0 %v551
    %640 = vmatpush.msra.mxu0 %v549
    %641 = vmatpush.msra.mxu0 %v547
    %642 = vmatpush.msra.mxu0 %v545
    %643 = vmatpush.msra.mxu0 %v543
    %644 = vmatpush.msra.mxu0 %v541
    %645 = vmatpush.msra.mxu0 %v539
    %646 = vmatpush.msra.mxu0 %v537
    %647 = vmatpush.msra.mxu0 %v535
    %648 = vmatpush.msra.mxu0 %v533
    %649 = vmatpush.msra.mxu0 %v531
    %650 = vmatpush.msra.mxu0 %v529
    %651 = vmatpush.msra.mxu0 %v527
    %652 = vmatmul.f32.gmra.mxu0 %v524
    %v653 = vpop.f32.mrf.mxu0
    %v654 = vadd.f32 %v593, %v653
    %655 = vdwg.mxu0
    %656 = vmatpush.msra.mxu0 %v589
    %657 = vmatpush.msra.mxu0 %v587
    %658 = vmatpush.msra.mxu0 %v585
    %659 = vmatpush.msra.mxu0 %v583
    %660 = vmatpush.msra.mxu0 %v581
    %661 = vmatpush.msra.mxu0 %v579
    %662 = vmatpush.msra.mxu0 %v577
    %663 = vmatpush.msra.mxu0 %v575
    %664 = vmatpush.msra.mxu0 %v573
    %665 = vmatpush.msra.mxu0 %v571
    %666 = vmatpush.msra.mxu0 %v569
    %667 = vmatpush.msra.mxu0 %v567
    %668 = vmatpush.msra.mxu0 %v565
    %669 = vmatpush.msra.mxu0 %v563
    %670 = vmatpush.msra.mxu0 %v561
    %671 = vmatpush.msra.mxu0 %v559
    %672 = vmatmul.f32.gmra.mxu0 %v525
    %v673 = vpop.f32.mrf.mxu0
    %v674 = vadd.f32 %v654, %v673
    %675 = vdwg.mxu0
    %v676 = vmax.f32 %v634, 0.0
    %v677 = vmax.f32 %v674, 0.0
    %v678 = vld [vmem:[%s7] sm:$0xff]
    %v679 = vld [vmem:[%s7 + $0x8] sm:$0xff]
    %v680 = vld [vmem:[%s7 + $0x10] sm:$0xff]
    %v681 = vld [vmem:[%s7 + $0x18] sm:$0xff]
    %v682 = vld [vmem:[%s7 + $0x20] sm:$0xff]
    %v683 = vld [vmem:[%s7 + $0x28] sm:$0xff]
    %v684 = vld [vmem:[%s7 + $0x30] sm:$0xff]
    %v685 = vld [vmem:[%s7 + $0x38] sm:$0xff]
    %v686 = vld [vmem:[%s7 + $0x40] sm:$0xff]
    %v687 = vld [vmem:[%s7 + $0x48] sm:$0xff]
    %v688 = vld [vmem:[%s7 + $0x50] sm:$0xff]
    %v689 = vld [vmem:[%s7 + $0x58] sm:$0xff]
    %v690 = vld [vmem:[%s7 + $0x60] sm:$0xff]
    %v691 = vld [vmem:[%s7 + $0x68] sm:$0xff]
    %v692 = vld [vmem:[%s7 + $0x70] sm:$0xff]
    %v693 = vld [vmem:[%s7 + $0x78] sm:$0xff]
    %v694 = vld [vmem:[%s8] sm:$0x1]
    %v696 = vperm.slane %v694, 0
    %698 = vmatpush.msra.mxu0 %v693
    %699 = vmatpush.msra.mxu0 %v692
    %700 = vmatpush.msra.mxu0 %v691
    %701 = vmatpush.msra.mxu0 %v690
    %702 = vmatpush.msra.mxu0 %v689
    %703 = vmatpush.msra.mxu0 %v688
    %704 = vmatpush.msra.mxu0 %v687
    %705 = vmatpush.msra.mxu0 %v686
    %706 = vmatpush.msra.mxu0 %v685
    %707 = vmatpush.msra.mxu0 %v684
    %708 = vmatpush.msra.mxu0 %v683
    %709 = vmatpush.msra.mxu0 %v682
    %710 = vmatpush.msra.mxu0 %v681
    %711 = vmatpush.msra.mxu0 %v680
    %712 = vmatpush.msra.mxu0 %v679
    %713 = vmatpush.msra.mxu0 %v678
    %714 = vmatmul.f32.gmra.mxu0 %v676
    %v715 = vpop.f32.mrf.mxu0
    %v716 = vadd.f32 %v696, %v715
    %717 = vdwg.mxu0
    %v718 = vld [vmem:[%s9] sm:$0xff]
    %v719 = vld [vmem:[%s9 + $0x8] sm:$0xff]
    %v720 = vld [vmem:[%s9 + $0x10] sm:$0xff]
    %v721 = vld [vmem:[%s9 + $0x18] sm:$0xff]
    %v722 = vld [vmem:[%s9 + $0x20] sm:$0xff]
    %v723 = vld [vmem:[%s9 + $0x28] sm:$0xff]
    %v724 = vld [vmem:[%s9 + $0x30] sm:$0xff]
    %v725 = vld [vmem:[%s9 + $0x38] sm:$0xff]
    %v726 = vld [vmem:[%s9 + $0x40] sm:$0xff]
    %v727 = vld [vmem:[%s9 + $0x48] sm:$0xff]
    %v728 = vld [vmem:[%s9 + $0x50] sm:$0xff]
    %v729 = vld [vmem:[%s9 + $0x58] sm:$0xff]
    %v730 = vld [vmem:[%s9 + $0x60] sm:$0xff]
    %v731 = vld [vmem:[%s9 + $0x68] sm:$0xff]
    %v732 = vld [vmem:[%s9 + $0x70] sm:$0xff]
    %v733 = vld [vmem:[%s9 + $0x78] sm:$0xff]
    %v734 = vld [vmem:[%s9 + $0x80] sm:$0xff]
    %v735 = vld [vmem:[%s9 + $0x88] sm:$0xff]
    %v736 = vld [vmem:[%s9 + $0x90] sm:$0xff]
    %v737 = vld [vmem:[%s9 + $0x98] sm:$0xff]
    %v738 = vld [vmem:[%s9 + $0xa0] sm:$0xff]
    %v739 = vld [vmem:[%s9 + $0xa8] sm:$0xff]
    %v740 = vld [vmem:[%s9 + $0xb0] sm:$0xff]
    %v741 = vld [vmem:[%s9 + $0xb8] sm:$0xff]
    %v742 = vld [vmem:[%s9 + $0xc0] sm:$0xff]
    %v743 = vld [vmem:[%s9 + $0xc8] sm:$0xff]
    %v744 = vld [vmem:[%s9 + $0xd0] sm:$0xff]
    %v745 = vld [vmem:[%s9 + $0xd8] sm:$0xff]
    %v746 = vld [vmem:[%s9 + $0xe0] sm:$0xff]
    %v747 = vld [vmem:[%s9 + $0xe8] sm:$0xff]
    %v748 = vld [vmem:[%s9 + $0xf0] sm:$0xff]
    %v749 = vld [vmem:[%s9 + $0xf8] sm:$0xff]
    %v750 = vld [vmem:[%s10] sm:$0x3]
    %v752 = vperm.slane %v750, 0
    %v753 = vperm.slane %v750, 1
    %756 = vmatpush.msra.mxu0 %v748
    %757 = vmatpush.msra.mxu0 %v746
    %758 = vmatpush.msra.mxu0 %v744
    %759 = vmatpush.msra.mxu0 %v742
    %760 = vmatpush.msra.mxu0 %v740
    %761 = vmatpush.msra.mxu0 %v738
    %762 = vmatpush.msra.mxu0 %v736
    %763 = vmatpush.msra.mxu0 %v734
    %764 = vmatpush.msra.mxu0 %v732
    %765 = vmatpush.msra.mxu0 %v730
    %766 = vmatpush.msra.mxu0 %v728
    %767 = vmatpush.msra.mxu0 %v726
    %768 = vmatpush.msra.mxu0 %v724
    %769 = vmatpush.msra.mxu0 %v722
    %770 = vmatpush.msra.mxu0 %v720
    %771 = vmatpush.msra.mxu0 %v718
    %772 = vmatmul.f32.gmra.mxu0 %v677
    %v773 = vpop.f32.mrf.mxu0
    %v774 = vadd.f32 %v752, %v773
    %775 = vdwg.mxu0
    %776 = vmatpush.msra.mxu0 %v749
    %777 = vmatpush.msra.mxu0 %v747
    %778 = vmatpush.msra.mxu0 %v745
    %779 = vmatpush.msra.mxu0 %v743
    %780 = vmatpush.msra.mxu0 %v741
    %781 = vmatpush.msra.mxu0 %v739
    %782 = vmatpush.msra.mxu0 %v737
    %783 = vmatpush.msra.mxu0 %v735
    %784 = vmatpush.msra.mxu0 %v733
    %785 = vmatpush.msra.mxu0 %v731
    %786 = vmatpush.msra.mxu0 %v729
    %787 = vmatpush.msra.mxu0 %v727
    %788 = vmatpush.msra.mxu0 %v725
    %789 = vmatpush.msra.mxu0 %v723
    %790 = vmatpush.msra.mxu0 %v721
    %791 = vmatpush.msra.mxu0 %v719
    %792 = vmatmul.f32.gmra.mxu0 %v677
    %v793 = vpop.f32.mrf.mxu0
    %v794 = vadd.f32 %v753, %v793
    %795 = vdwg.mxu0
    %797 = vrot.lane.b32.xlu0 %v774, 77
    %v798 = vpop.permute.xlu0 %797
    %801 = vrot.lane.b32.xlu0 %v774, 26
    %v802 = vpop.permute.xlu0 %801
    %803 = vrot.lane.b32.xlu0 %v794, 26
    %v804 = vpop.permute.xlu0 %803
    %vm805 = vcmask 211968
    %v806 = vsel %vm805, %v802, %v804
    %808 = vrot.lane.b32.xlu0 %v794, 103
    %v809 = vpop.permute.xlu0 %808
    %v811 = vrot.slane %v806, 4
    %vm812 = vcmask 1047556
    %v813 = vsel %vm812, %v811, %v774
    %v815 = vunpack.c.l.s4 1983009808
    %v816 = vunpack.c.0.s8 %v815
    %v817 = vperm.slane %v813, %v816
    %v818 = vrot.slane %v809, 4
    %v819 = vsel %vm812, %v818, %v798
    %v821 = vunpack.c.l.s4 1983009808
    %v822 = vunpack.c.0.s8 %v821
    %v823 = vperm.slane %v819, %v822
    %v824 = vrot.slane %v823, 4
    %v825 = vsel %vm812, %v824, %v817
    %v827 = vunpack.c.l.s4 1934713408
    %v828 = vunpack.c.0.s8 %v827
    %v829 = vperm.slane %v825, %v828
    %v830 = vrot.slane %v829, 4
    %v831 = vsel %vm812, 0.0, %v830
    %vm832 = vcmask 412672
    %v833 = vsel %vm832, %v829, 0.0
    %v834 = vrot.slane %v833, 4
    %v835 = vadd.f32 %v833, %v834
    %v836 = vrot.slane %v835, 2
    %v837 = vadd.f32 %v835, %v836
    %v838 = vrot.slane %v837, 1
    %v839 = vadd.f32 %v837, %v838
    %v840 = vsel %vm832, %v831, 0.0
    %v841 = vrot.slane %v840, 4
    %v842 = vadd.f32 %v840, %v841
    %v843 = vrot.slane %v842, 2
    %v844 = vadd.f32 %v842, %v843
    %v845 = vrot.slane %v844, 1
    %v846 = vadd.f32 %v844, %v845
    %v847 = vrcp.pop 4.0
    %v848 = vmul.f32 4.0, %v847
    %v849 = vsub.f32 1.0, %v848
    %v850 = vmul.f32 %v847, %v849
    %v851 = vadd.f32 %v847, %v850
    %vm852 = vweird.f32 %v847
    %v853 = vsel %vm852, %v847, %v851
    %v854 = vmul.f32 %v839, %v853
    %v855 = vmul.f32 %v846, %v853
    %v857 = vrot.slane %v716, 1
    %v858 = vsub.f32 %v829, %v854
    %v859 = vsub.f32 %v831, %v855
    %v860 = vperm.slane %v716, 0
    %v861 = vperm.slane %v857, 0
    %v864 = vadd.f32 %v860, %v858
    %v865 = vadd.f32 %v861, %v859
    %v866 = vsel %vm832, %v864, -inf
    %867 = vmax.xlane.f32.xlu0 %v866
    %v868 = vpop.xlane.xlu0 %867
    %v869 = vsel %vm832, %v865, -inf
    %870 = vmax.xlane.f32.xlu0 %v869
    %v871 = vpop.xlane.xlu0 %870
    %v872 = vsub.f32 %v864, %v868
    %v873 = vsub.f32 %v865, %v871
    %v874 = vmul.f32 %v872, 1.442695
    %v875 = vpow.pop %v874
    %v876 = vmul.f32 %v873, 1.442695
    %v877 = vpow.pop %v876
    %v878 = vsel %vm832, %v875, 0.0
    %879 = vadd.xlane.f32.xlu0 %v878
    %v880 = vpop.xlane.xlu0 %879
    %v881 = vsel %vm832, %v877, 0.0
    %882 = vadd.xlane.f32.xlu0 %v881
    %v883 = vpop.xlane.xlu0 %882
    %v884 = vrcp.pop %v880
    %v885 = vmul.f32 %v880, %v884
    %v886 = vsub.f32 1.0, %v885
    %v887 = vmul.f32 %v884, %v886
    %v888 = vadd.f32 %v884, %v887
    %vm889 = vweird.f32 %v880
    %vm890 = vweird.f32 %v884
    %vm891 = vmor %vm889, %vm890
    %v892 = vsel %vm891, %v884, %v888
    %v893 = vand.u32 2147483647, %v880
    %vm894 = vcmp.eq.f32.partialorder %v893, 8.507059e+37
    %v895 = vand.u32 %v880, 2147483648
    %v896 = vor.u32 1.1754944e-38, %v895
    %v897 = vsel %vm894, %v896, %v892
    %v898 = vrcp.pop %v883
    %v899 = vmul.f32 %v883, %v898
    %v900 = vsub.f32 1.0, %v899
    %v901 = vmul.f32 %v898, %v900
    %v902 = vadd.f32 %v898, %v901
    %vm903 = vweird.f32 %v883
    %vm904 = vweird.f32 %v898
    %vm905 = vmor %vm903, %vm904
    %v906 = vsel %vm905, %v898, %v902
    %v907 = vand.u32 2147483647, %v883
    %vm908 = vcmp.eq.f32.partialorder %v907, 8.507059e+37
    %v909 = vand.u32 %v883, 2147483648
    %v910 = vor.u32 1.1754944e-38, %v909
    %v911 = vsel %vm908, %v910, %v906
    %v912 = vmul.f32 %v875, %v897
    %v913 = vmul.f32 %v877, %v911
    %v914 = vmax.f32 %v912, 1e-05
    %v916 = vunpack.c.l.s4 1983009808
    %v917 = vunpack.c.0.s8 %v916
    %v918 = vperm.slane %v914, %v917
    %v919 = vmax.f32 %v913, 1e-05
    %v921 = vunpack.c.l.s4 1983009808
    %v922 = vunpack.c.0.s8 %v921
    %v923 = vperm.slane %v919, %v922
    %v924 = vrot.slane %v923, 4
    %v925 = vsel %vm812, %v924, %v918
    %v926 = vrot.slane %v918, 4
    %v927 = vsel %vm812, %v923, %v926
    %v929 = vunpack.c.l.s4 1934713408
    %v930 = vunpack.c.0.s8 %v929
    %v931 = vperm.slane %v925, %v930
    %v933 = vunpack.c.l.s4 1934713408
    %v934 = vunpack.c.0.s8 %v933
    %v935 = vperm.slane %v927, %v934
    %v936 = vrot.slane %v931, 4
    %v937 = vsel %vm812, 0.0, %v936
    %v938 = vrot.slane %v935, 4
    %v939 = vsel %vm812, 0.0, %v938
    %941 = vrot.lane.b32.xlu0 %v937, 51
    %v942 = vpop.permute.xlu0 %941
    %945 = vrot.lane.b32.xlu0 %v935, 102
    %v946 = vpop.permute.xlu0 %945
    %949 = vrot.lane.b32.xlu0 %v939, 25
    %v950 = vpop.permute.xlu0 %949
    %vm952 = vcmask 416768
    %v953 = vsel %vm952, %v931, %v942
    %vm954 = vcmask 834560
    %v955 = vsel %vm954, %v953, %v946
    %vm956 = vcmask 203776
    %v957 = vsel %vm956, %v946, %v950
    %v960 = vrot.slane %v957, 6
    %vm961 = vcmask 1041408
    %v962 = vsel %vm961, %v955, %v960
    %vm964 = vcmask 617474
    %vm965 = vmor %vm964, %vm961
    %966 = vst.msk [vmem:[#allocation5] sm:$0xf] %vm965, %v962
    // Predicated region
    $region50: #{tpu_custom_call.1} parent=1 // pred_check
      _
    $region51: #{tpu_custom_call.1} parent=1 // pred_check_branch
      %968 = sbr.rel (0) target = $region53
    $region52: #{tpu_custom_call.1} parent=1 // pred_region
      %970 = vsyncadd [#allocation4], 0
      %s972 = sshll.u32 [#allocation5], 4
      %s973 = int_to_ptr.vmem [resolvable:$true] %s972
      %s974 = sshll.u32 %s11, 4
      %s975 = int_to_ptr.hbm [resolvable:$true] %s974
      %977 = dma.vmem_to_hbm [thread:$0]  %s973, 64, %s975, [#allocation4]
    $region53: #{tpu_custom_call.1} parent=1 // pred_fallthru
      _
    // Predicated region
    $region54: #{tpu_custom_call.1} parent=1 // pred_check
      _
    $region55: #{tpu_custom_call.1} parent=1 // pred_check_branch
      %979 = sbr.rel (0) target = $region57
    $region56: #{tpu_custom_call.1} parent=1 // pred_region
      %981 = dma.done [#allocation4], 64
    $region57: #{tpu_custom_call.1} parent=1 // pred_fallthru
      _
    %982 = vsyncpa [#allocation3], 1
    %983 = vsyncpa [#allocation4], 1

</llo_original>
